<compile_context>
chip_gen: v5e
topology: v5e:2x2
jax: 0.10.0
libtpu: 0.0.40
codegen_flags: <defaults>
</compile_context>

<pallas_src>
import math
import functools

import jax
import jax.numpy as jnp
from jax import lax
from jax.experimental import pallas as pl
from jax.experimental.pallas import tpu as pltpu


def _arc_margin_kernel(xn_ref, w_ref, label_ref, o_ref, *,
                       scale, cos_m, sin_m, th, mm,
                       easy_margin, ls_eps, out_features, tile_c):
    j = pl.program_id(1)                       # class-tile index (minor grid axis)

    x_n = xn_ref[...]                          # [TB, D]  pre-normalized rows
    w = w_ref[...]                             # [TC, D]  raw (un-normalized) rows

    # raw[b, c] = <x_n[b], w[c]>  -- NT contraction (flash-attn q@k^T pattern),
    # goes straight to the MXU with f32 accumulation.
    raw = lax.dot_general(x_n, w, (((1,), (1,)), ((), ())),
                          preferred_element_type=jnp.float32)   # [TB, TC]

    # Deferred weight normalization: scale columns by 1/||w_c|| after the
    # matmul instead of normalizing the whole [TC, D] tile before it.
    # max(ssq, 1e-24) matches F.normalize's max(||w||, 1e-12).
    wf = w.astype(jnp.float32)
    w_ssq = jnp.sum(wf * wf, axis=-1)                           # [TC]
    inv_wn = lax.rsqrt(jnp.maximum(w_ssq, 1e-24))
    cosine = raw * inv_wn[None, :]                              # [TB, TC]

    # ArcFace epilogue with `scale` folded into the constants.
    cos_s = cosine * scale
    sine = jnp.sqrt(jnp.maximum(1.0 - cosine * cosine, 0.0))
    phi_s = cosine * (cos_m * scale) - sine * (sin_m * scale)
    if easy_margin:
        phi_s = jnp.where(cosine > 0.0, phi_s, cos_s)
    else:
        phi_s = jnp.where(cosine > th, phi_s, cos_s - mm * scale)

    # one-hot(label) selection via class-index comparison (scatter_ equivalent)
    tb, tc = cosine.shape
    class_idx = j * tile_c + lax.broadcasted_iota(jnp.int32, (tb, tc), 1)
    match = class_idx == label_ref[...]        # label_ref: [TB, 1] int32

    if ls_eps > 0.0:
        one_hot = (1.0 - ls_eps) * match.astype(jnp.float32) + ls_eps / out_features
        out = one_hot * phi_s + (1.0 - one_hot) * cos_s
    else:
        out = jnp.where(match, phi_s, cos_s)

    o_ref[...] = out.astype(o_ref.dtype)


def arc_margin_product(x, weight, label, *, scale=30.0, margin=0.5,
                       easy_margin=False, ls_eps=0.0,
                       tile_c=1024, tile_b=256,
                       stream_bf16=True, logits_dtype=jnp.float32):
    """x: [B, D], weight: [C, D], label: [B] int -> ArcFace logits [B, C]."""
    B, D = x.shape
    C, D2 = weight.shape
    assert D == D2
    assert label.shape == (B,)

    cos_m = math.cos(margin)
    sin_m = math.sin(margin)
    th = math.cos(math.pi - margin)
    mm = math.sin(math.pi - margin) * margin

    # TODO(synk): optional fp8 (e4m3) weight streaming on v7x (MXU-native);
    # the deferred rsqrt(w_ssq) column scale already acts as the dequant.
    compute_dtype = jnp.bfloat16 if stream_bf16 else jnp.float32

    # F.normalize(x) hoisted out of the class-tile loop: done once in f32 and
    # rounded once to the streaming dtype.
    xf = x.astype(jnp.float32)
    x_ssq = jnp.sum(xf * xf, axis=-1, keepdims=True)
    x_n = (xf * lax.rsqrt(jnp.maximum(x_ssq, 1e-24))).astype(compute_dtype)

    # Weights are streamed raw; normalization is deferred to the in-kernel
    # post-matmul column scale, so bf16 streaming rounds them only once.
    w = weight.astype(compute_dtype)

    # ---- class tiling -------------------------------------------------------
    tile_c = min(int(tile_c), C)
    if tile_c < C:
        tile_c = max(128, (tile_c // 128) * 128)     # lane-aligned class tiles
        tile_c = min(tile_c, C)
    n_c = pl.cdiv(C, tile_c)
    c_pad = n_c * tile_c
    if c_pad != C:
        # Zero-pad the *input* rows only: padded rows give cosine == 0, are
        # never label-matched, and their output columns land in the ragged
        # part of the last block, which Pallas masks on writeback.  The output
        # keeps its true (B, C) shape, so there is no post-hoc slice copy.
        w = jnp.pad(w, ((0, c_pad - C), (0, 0)))

    # ---- batch tiling (feeds both v7x TensorCores, bounds resident VMEM) ----
    tile_b = min(int(tile_b), B)
    if tile_b < B:
        tile_b = max(8, (tile_b // 8) * 8)           # sublane-aligned
        tile_b = min(tile_b, B)
    n_b = pl.cdiv(B, tile_b)
    b_pad = n_b * tile_b

    label2d = label.astype(jnp.int32).reshape(B, 1)
    if b_pad != B:
        x_n = jnp.pad(x_n, ((0, b_pad - B), (0, 0)))
        label2d = jnp.pad(label2d, ((0, b_pad - B), (0, 0)), constant_values=-1)

    kernel = functools.partial(
        _arc_margin_kernel,
        scale=float(scale), cos_m=cos_m, sin_m=sin_m, th=th, mm=mm,
        easy_margin=bool(easy_margin), ls_eps=float(ls_eps),
        out_features=C, tile_c=tile_c,
    )

    # VMEM budget: double-buffered blocks + headroom for the in-kernel f32
    # temporaries of the weight tile.  Capped at 48 MiB (v7x has only 64 MiB
    # physical VMEM per TensorCore); no artificial 32 MiB floor.
    in_item = jnp.dtype(compute_dtype).itemsize
    out_item = jnp.dtype(logits_dtype).itemsize
    est = (2 * tile_c * D * in_item            # weight tiles (double-buffered)
           + 2 * tile_b * D * in_item          # x tiles
           + 2 * tile_b * tile_c * out_item    # output tiles
           + 2 * tile_b * 4                    # labels
           + 2 * tile_c * D * 4)               # f32 temporaries for w_ssq
    vmem_limit = int(min(max(2 * est, 16 << 20), 48 << 20))

    grid = (n_b, n_c)
    out = pl.pallas_call(
        kernel,
        out_shape=jax.ShapeDtypeStruct((B, C), logits_dtype),
        grid_spec=pltpu.PrefetchScalarGridSpec(
            num_scalar_prefetch=0,
            grid=grid,
            in_specs=[
                pl.BlockSpec((tile_b, D), lambda i, j: (i, 0)),   # x_n
                pl.BlockSpec((tile_c, D), lambda i, j: (j, 0)),   # weight tile
                pl.BlockSpec((tile_b, 1), lambda i, j: (i, 0)),   # labels
            ],
            out_specs=pl.BlockSpec((tile_b, tile_c), lambda i, j: (i, j)),
        ),
        compiler_params=pltpu.CompilerParams(
            dimension_semantics=("parallel", "parallel"),
            vmem_limit_bytes=vmem_limit),
    )(x_n, w, label2d)
    return out


def _reference(x, weight, label, *, scale=30.0, margin=0.5,
               easy_margin=False, ls_eps=0.0):
    cos_m, sin_m = math.cos(margin), math.sin(margin)
    th = math.cos(math.pi - margin)
    mm = math.sin(math.pi - margin) * margin
    xn = x / jnp.maximum(jnp.linalg.norm(x, axis=-1, keepdims=True), 1e-12)
    wn = weight / jnp.maximum(jnp.linalg.norm(weight, axis=-1, keepdims=True), 1e-12)
    cosine = xn @ wn.T
    sine = jnp.sqrt(jnp.clip(1.0 - cosine ** 2, 0.0, 1.0))
    phi = cosine * cos_m - sine * sin_m
    phi = jnp.where(cosine > 0, phi, cosine) if easy_margin else \
        jnp.where(cosine > th, phi, cosine - mm)
    one_hot = jax.nn.one_hot(label, weight.shape[0], dtype=jnp.float32)
    if ls_eps > 0:
        one_hot = (1 - ls_eps) * one_hot + ls_eps / weight.shape[0]
    return (one_hot * phi + (1 - one_hot) * cosine) * scale


if __name__ == "__main__":
    # Small shapes consistent with the module: in_features=32, out_features=256.
    B, D, C = 16, 32, 256
    key = jax.random.PRNGKey(0)
    kx, kw, kl = jax.random.split(key, 3)

    x = jax.random.normal(kx, (B, D), dtype=jnp.float32)

    # Deterministic xavier_uniform_-style init for weight [out_features, in_features].
    bound = math.sqrt(6.0 / (D + C))
    weight = jax.random.uniform(kw, (C, D), dtype=jnp.float32,
                                minval=-bound, maxval=bound)
    label = jax.random.randint(kl, (B,), 0, C, dtype=jnp.int32)

    ref = _reference(x, weight, label)

    # 1) f32 path, 2-D (batch x class) grid: tile_b=8 -> 2 batch tiles,
    #    tile_c=128 -> 2 class tiles.  Tight tolerance.
    out = jax.block_until_ready(
        arc_margin_product(x, weight, label, tile_c=128, tile_b=8,
                           stream_bf16=False))
    assert out.shape == (B, C) and out.dtype == jnp.float32
    assert jnp.allclose(out, ref, atol=1e-4, rtol=1e-4)

    # 2) ragged class count (C=200 with tile_c=128 -> masked last output block,
    #    no post-hoc slice) plus label smoothing, f32 path.
    C2 = 200
    w2 = weight[:C2]
    lab2 = jnp.clip(label, 0, C2 - 1)
    out2 = jax.block_until_ready(
        arc_margin_product(x, w2, lab2, ls_eps=0.1, tile_c=128,
                           stream_bf16=False))
    ref2 = _reference(x, w2, lab2, ls_eps=0.1)
    assert out2.shape == (B, C2)
    assert jnp.allclose(out2, ref2, atol=1e-4, rtol=1e-4)

    # 3) default bf16 weight/x streaming path (halved HBM weight bytes);
    #    relaxed tolerance covers the single bf16 rounding of raw inputs.
    out3 = jax.block_until_ready(
        arc_margin_product(x, weight, label, tile_c=128, tile_b=8))
    assert out3.shape == (B, C)
    assert jnp.allclose(out3, ref, atol=0.5, rtol=0.05)

    # 4) easy-margin variant with default (single full-size) tiles, f32 path.
    out4 = jax.block_until_ready(
        arc_margin_product(x, weight, label, easy_margin=True,
                           stream_bf16=False))
    ref4 = _reference(x, weight, label, easy_margin=True)
    assert jnp.allclose(out4, ref4, atol=1e-4, rtol=1e-4)

    print("KERNEL_OK")
</pallas_src>

<mosaic_0001>
module attributes {stable_mosaic.version = 11 : i64} {
  func.func @_arc_margin_kernel(%arg0: i32, %arg1: i32, %arg2: memref<8x32xf32, #tpu.memory_space<vmem>>, %arg3: memref<128x32xf32, #tpu.memory_space<vmem>>, %arg4: memref<8x1xi32, #tpu.memory_space<vmem>>, %arg5: memref<8x128xf32, #tpu.memory_space<vmem>>) attributes {dimension_semantics = [#tpu.dimension_semantics<parallel>, #tpu.dimension_semantics<parallel>], iteration_bounds = array<i64: 2, 2>, scalar_prefetch = 0 : i64, scratch_operands = 0 : i64, tpu.core_type = #tpu.core_type<tc>, window_params = [{transform_indices = @transform_0, window_bounds = array<i64: 8, 32>}, {transform_indices = @transform_1, window_bounds = array<i64: 128, 32>}, {transform_indices = @transform_2, window_bounds = array<i64: 8, 1>}, {transform_indices = @transform_3, window_bounds = array<i64: 8, 128>}]} {
    %c0 = arith.constant 0 : index
    %c0_0 = arith.constant 0 : index
    %0 = vector.load %arg2[%c0, %c0_0] : memref<8x32xf32, #tpu.memory_space<vmem>>, vector<8x32xf32>
    %c0_1 = arith.constant 0 : index
    %c0_2 = arith.constant 0 : index
    %1 = vector.load %arg3[%c0_1, %c0_2] : memref<128x32xf32, #tpu.memory_space<vmem>>, vector<128x32xf32>
    %cst = arith.constant dense<0.000000e+00> : vector<8x128xf32>
    %2 = tpu.matmul %0, %1, %cst {dimension_numbers = #tpu.dot_dimension_numbers<[1], [1], [0], [0], [0, 0, 1, 0], [], []>} : vector<8x32xf32>, vector<128x32xf32>, vector<8x128xf32> -> vector<8x128xf32>
    %3 = arith.mulf %1, %1 : vector<128x32xf32>
    %cst_3 = arith.constant dense<0.000000e+00> : vector<128xf32>
    %4 = vector.multi_reduction <add>, %3, %cst_3 [1] : vector<128x32xf32> to vector<128xf32>
    %cst_4 = arith.constant 1.000000e-24 : f32
    %5 = vector.broadcast %cst_4 : f32 to vector<128xf32>
    %6 = arith.maximumf %4, %5 : vector<128xf32>
    %7 = math.rsqrt %6 : vector<128xf32>
    %8 = vector.shape_cast %7 : vector<128xf32> to vector<1x128xf32>
    %9 = vector.broadcast %8 : vector<1x128xf32> to vector<8x128xf32>
    %10 = arith.mulf %2, %9 : vector<8x128xf32>
    %cst_5 = arith.constant 3.000000e+01 : f32
    %11 = vector.broadcast %cst_5 : f32 to vector<8x128xf32>
    %12 = arith.mulf %10, %11 : vector<8x128xf32>
    %13 = arith.mulf %10, %10 : vector<8x128xf32>
    %cst_6 = arith.constant 1.000000e+00 : f32
    %14 = vector.broadcast %cst_6 : f32 to vector<8x128xf32>
    %15 = arith.subf %14, %13 : vector<8x128xf32>
    %cst_7 = arith.constant 0.000000e+00 : f32
    %16 = vector.broadcast %cst_7 : f32 to vector<8x128xf32>
    %17 = arith.maximumf %15, %16 : vector<8x128xf32>
    %18 = math.sqrt %17 : vector<8x128xf32>
    %cst_8 = arith.constant 26.3274765 : f32
    %19 = vector.broadcast %cst_8 : f32 to vector<8x128xf32>
    %20 = arith.mulf %10, %19 : vector<8x128xf32>
    %cst_9 = arith.constant 14.3827658 : f32
    %21 = vector.broadcast %cst_9 : f32 to vector<8x128xf32>
    %22 = arith.mulf %18, %21 : vector<8x128xf32>
    %23 = arith.subf %20, %22 : vector<8x128xf32>
    %cst_10 = arith.constant -0.87758255 : f32
    %24 = vector.broadcast %cst_10 : f32 to vector<8x128xf32>
    %25 = arith.cmpf ogt, %10, %24 : vector<8x128xf32>
    %cst_11 = arith.constant 7.19138288 : f32
    %26 = vector.broadcast %cst_11 : f32 to vector<8x128xf32>
    %27 = arith.subf %12, %26 : vector<8x128xf32>
    %28 = arith.select %25, %23, %27 : vector<8x128xi1>, vector<8x128xf32>
    %c128_i32 = arith.constant 128 : i32
    %29 = arith.muli %arg1, %c128_i32 : i32
    %30 = tpu.iota {dimensions = array<i32: 1>} : vector<8x128xi32>
    %31 = vector.broadcast %29 : i32 to vector<8x128xi32>
    %32 = arith.addi %31, %30 : vector<8x128xi32>
    %c0_12 = arith.constant 0 : index
    %c0_13 = arith.constant 0 : index
    %33 = vector.load %arg4[%c0_12, %c0_13] : memref<8x1xi32, #tpu.memory_space<vmem>>, vector<8x1xi32>
    %34 = vector.broadcast %33 : vector<8x1xi32> to vector<8x128xi32>
    %35 = arith.cmpi eq, %32, %34 : vector<8x128xi32>
    %36 = arith.select %35, %28, %12 : vector<8x128xi1>, vector<8x128xf32>
    %c0_14 = arith.constant 0 : index
    %c0_15 = arith.constant 0 : index
    %37 = vector.load %arg5[%c0_14, %c0_15] : memref<8x128xf32, #tpu.memory_space<vmem>>, vector<8x128xf32>
    tpu.vector_store %arg5[%c0_14, %c0_15], %36 {strides = array<i32>} : memref<8x128xf32, #tpu.memory_space<vmem>>, vector<8x128xf32>,
    return
  }
  func.func @transform_0(%arg0: i32, %arg1: i32) -> (i32, i32) {
    %c0_i32 = arith.constant 0 : i32
    %c0_i32_0 = arith.constant 0 : i32
    return %arg0, %c0_i32 : i32, i32
  }
  func.func @transform_1(%arg0: i32, %arg1: i32) -> (i32, i32) {
    %c0_i32 = arith.constant 0 : i32
    %c0_i32_0 = arith.constant 0 : i32
    return %arg1, %c0_i32 : i32, i32
  }
  func.func @transform_2(%arg0: i32, %arg1: i32) -> (i32, i32) {
    %c0_i32 = arith.constant 0 : i32
    %c0_i32_0 = arith.constant 0 : i32
    return %arg0, %c0_i32 : i32, i32
  }
  func.func @transform_3(%arg0: i32, %arg1: i32) -> (i32, i32) {
    %c0_i32 = arith.constant 0 : i32
    return %arg0, %arg1 : i32, i32
  }
}

</mosaic_0001>

<llo_original>
// kernel: tpu_custom_call.1
$region0: #{tpu_custom_call.1}
  #allocation0 [shape = 'u32[]', space=smem, size = 0x4, offset = 0x4, fixed_abs, tag = 'smem constant byte address 0x4 - core index']
  #allocation1 [shape = 'u32[72,128]{1,0:T(1,128)}', space=vmem, size = 0x9000, scoped, tag = 'internal scratch']
  %s0 = inlined_call_operand.vmem [shape: f32[16,32], index: 0, kind: input, shape index: {}]
  %s1 = inlined_call_operand.vmem [shape: f32[256,32], index: 1, kind: input, shape index: {}]
  %s2 = inlined_call_operand.vmem [shape: s32[16,1], index: 2, kind: input, shape index: {}]
  %s3 = inlined_call_operand.hbm [shape: f32[16,256], index: 3, kind: output, shape index: {}]
  %s4 = sld [smem:[#allocation0]]
  $region45: #{tpu_custom_call.1} parent=0
    _
  %s6 = ssub.s32 1, %s4
  %s7 = scalar_select 0, %s6, %s4
  $region1: #{tpu_custom_call.1} parent=0
    #allocation2 [shape = 'u8[8192]{0}', space=vmem, size = 0x2000, scoped, tag = 'output window, operand 0']
    #allocation3 [shape = 's32[2]{0}', space=sflag, size = 0x8, scoped, tag = 'scoped memory for tpu_custom_call.1']
    %8 = vsyncpa [#allocation3], 0
    %s9 = scalar_lea.sflag [#allocation3], 1
    %10 = vsyncpa %s9, 0
    loop: start=0, step=1, limit=6
    $region2: #{tpu_custom_call.1} parent=1 // loop_pre_header
      _
    $region3: #{tpu_custom_call.1} parent=1 // loop_header
      %s12 = sphi 0, %s16
      %p13 = scmp.ge.s32.totalorder %s12, 6
      %s19 = sphi 0, %s31
      %s20 = sphi 0, %s27
      %s21 = sphi 0, %s19
      %s22 = sphi 0, %s20
      %s23 = sphi 0, %s21
      %s24 = sphi 0, %s22
      %s34 = sphi 0, %s36
      %s37 = sphi 0, %s34
      %s38 = sphi 0, %s37
      %s54 = sphi 0, %s38
      %s60 = sphi 0, %s62
      %s63 = sphi 0, %s60
      %s64 = sphi 0, %s63
      %s80 = sphi 0, %s64
      %s86 = sphi 0, %s88
      %s89 = sphi 0, %s86
      %s90 = sphi 0, %s89
      %s106 = sphi 0, %s90
      %s114 = sphi 0, %s116
      %s117 = sphi 0, %s114
      %s118 = sphi 0, %s117
      %s134 = sphi 0, %s118
    $region4: #{tpu_custom_call.1} parent=1 // loop_header_branch
      %15 = sbr.rel (%p13) target = $region8
    $region5: #{tpu_custom_call.1} parent=1 // loop_body
      %s17 = ssub.s32 %s12, 1
      %s18 = ssub.s32 %s12, 2
      %s25 = sadd.s32 1, %s20
      %p26 = scmp.ge.s32.totalorder %s25, 2
      %s27 = scalar_select %p26, 0, %s25
      %s28 = sadd.s32 1, %s19
      %s29 = scalar_select %p26, %s28, %s19
      %p30 = scmp.ge.s32.totalorder %s29, 2
      %s31 = scalar_select %p30, 0, %s29
      %s32 = ssub.s32 %s19, %s31
      %p33 = scmp.eq.s32.totalorder %s32, 0
      %s35 = sadd.s32 %s34, 1
      %s36 = scalar_select %p33, %s34, %s35
      %p39 = pneg %p33
      %p40 = scmp.eq.s32.totalorder %s12, 3
      %p41 = por %p39, %p40
      %p42 = scmp.ne.s32.totalorder %s34, %s37
      %p43 = scmp.eq.s32.totalorder %s12, 0
      %p44 = por %p42, %p43
      %p45 = scmp.ne.s32.totalorder %s34, %s37
      %p46 = scmp.eq.s32.totalorder %s17, 3
      %p47 = por %p45, %p46
      %p48 = scmp.ne.s32.totalorder %s37, %s38
      %p49 = scmp.eq.s32.totalorder %s17, 0
      %p50 = por %p48, %p49
      %p51 = scmp.ne.s32.totalorder %s37, %s38
      %p52 = scmp.eq.s32.totalorder %s18, 3
      %p53 = por %p51, %p52
      %p55 = scmp.ne.s32.totalorder %s38, %s54
      %p56 = scmp.eq.s32.totalorder %s18, 0
      %p57 = por %p55, %p56
      %s58 = ssub.s32 %s20, %s27
      %p59 = scmp.eq.s32.totalorder %s58, 0
      %s61 = sadd.s32 %s60, 1
      %s62 = scalar_select %p59, %s60, %s61
      %p65 = pneg %p59
      %p66 = scmp.eq.s32.totalorder %s12, 3
      %p67 = por %p65, %p66
      %p68 = scmp.ne.s32.totalorder %s60, %s63
      %p69 = scmp.eq.s32.totalorder %s12, 0
      %p70 = por %p68, %p69
      %p71 = scmp.ne.s32.totalorder %s60, %s63
      %p72 = scmp.eq.s32.totalorder %s17, 3
      %p73 = por %p71, %p72
      %p74 = scmp.ne.s32.totalorder %s63, %s64
      %p75 = scmp.eq.s32.totalorder %s17, 0
      %p76 = por %p74, %p75
      %p77 = scmp.ne.s32.totalorder %s63, %s64
      %p78 = scmp.eq.s32.totalorder %s18, 3
      %p79 = por %p77, %p78
      %p81 = scmp.ne.s32.totalorder %s64, %s80
      %p82 = scmp.eq.s32.totalorder %s18, 0
      %p83 = por %p81, %p82
      %s84 = ssub.s32 %s19, %s31
      %p85 = scmp.eq.s32.totalorder %s84, 0
      %s87 = sadd.s32 %s86, 1
      %s88 = scalar_select %p85, %s86, %s87
      %p91 = pneg %p85
      %p92 = scmp.eq.s32.totalorder %s12, 3
      %p93 = por %p91, %p92
      %p94 = scmp.ne.s32.totalorder %s86, %s89
      %p95 = scmp.eq.s32.totalorder %s12, 0
      %p96 = por %p94, %p95
      %p97 = scmp.ne.s32.totalorder %s86, %s89
      %p98 = scmp.eq.s32.totalorder %s17, 3
      %p99 = por %p97, %p98
      %p100 = scmp.ne.s32.totalorder %s89, %s90
      %p101 = scmp.eq.s32.totalorder %s17, 0
      %p102 = por %p100, %p101
      %p103 = scmp.ne.s32.totalorder %s89, %s90
      %p104 = scmp.eq.s32.totalorder %s18, 3
      %p105 = por %p103, %p104
      %p107 = scmp.ne.s32.totalorder %s90, %s106
      %p108 = scmp.eq.s32.totalorder %s18, 0
      %p109 = por %p107, %p108
      %s110 = ssub.s32 %s19, %s31
      %s111 = ssub.s32 %s20, %s27
      %s112 = sor.u32 %s110, %s111
      %p113 = scmp.eq.s32.totalorder %s112, 0
      %s115 = sadd.s32 %s114, 1
      %s116 = scalar_select %p113, %s114, %s115
      %p119 = pneg %p113
      %p120 = scmp.eq.s32.totalorder %s12, 3
      %p121 = por %p119, %p120
      %p122 = scmp.ne.s32.totalorder %s114, %s117
      %p123 = scmp.eq.s32.totalorder %s12, 0
      %p124 = por %p122, %p123
      %p125 = scmp.ne.s32.totalorder %s114, %s117
      %p126 = scmp.eq.s32.totalorder %s17, 3
      %p127 = por %p125, %p126
      %p128 = scmp.ne.s32.totalorder %s117, %s118
      %p129 = scmp.eq.s32.totalorder %s17, 0
      %p130 = por %p128, %p129
      %p131 = scmp.ne.s32.totalorder %s117, %s118
      %p132 = scmp.eq.s32.totalorder %s18, 3
      %p133 = por %p131, %p132
      %p135 = scmp.ne.s32.totalorder %s118, %s134
      %p136 = scmp.eq.s32.totalorder %s18, 0
      %p137 = por %p135, %p136
      %p138 = scmp.le.s32.totalorder 1, %s12
      %p139 = scmp.lt.s32.totalorder %s12, 5
      %p140 = pnand %p138, %p139
      %p141 = pneg %p140
      // Predicated region
      $region9: #{tpu_custom_call.1} parent=5 // pred_check
        _
      $region10: #{tpu_custom_call.1} parent=5 // pred_check_branch
        %143 = sbr.rel (%p140) target = $region12
      $region11: #{tpu_custom_call.1} parent=5 // pred_region
        %s144 = ssub.s32 %s12, 1
      $region12: #{tpu_custom_call.1} parent=5 // pred_fallthru
        _
      %p145 = scmp.lt.s32.totalorder %s12, 4
      // Predicated region
      $region13: #{tpu_custom_call.1} parent=5 // pred_check
        %p146 = pneg %p145
      $region14: #{tpu_custom_call.1} parent=5 // pred_check_branch
        %148 = sbr.rel (%p146) target = $region16
      $region15: #{tpu_custom_call.1} parent=5 // pred_region
        // Predicated region
        $region17: #{tpu_custom_call.1} parent=15 // pred_check
          %p149 = pneg %p44
        $region18: #{tpu_custom_call.1} parent=15 // pred_check_branch
          %151 = sbr.rel (%p149) target = $region20
        $region19: #{tpu_custom_call.1} parent=15 // pred_region
          %p152 = scmp.lt.s32.totalorder %s19, 1
          %s153 = scalar_select %p152, %s19, 1
          %s154 = smul.addr %s153, 8
          %s155 = scalar_lea.vmem %s0, %s154
        $region20: #{tpu_custom_call.1} parent=15 // pred_fallthru
          _
        // Predicated region
        $region21: #{tpu_custom_call.1} parent=15 // pred_check
          %p156 = pneg %p70
        $region22: #{tpu_custom_call.1} parent=15 // pred_check_branch
          %158 = sbr.rel (%p156) target = $region24
        $region23: #{tpu_custom_call.1} parent=15 // pred_region
          %s159 = smul.u32 16, %s20
          %p160 = scmp.lt.s32.totalorder %s159, 31
          %s161 = scalar_select %p160, %s159, 31
          %s162 = smul.addr %s161, 8
          %s163 = scalar_lea.vmem %s1, %s162
          %s164 = smul.u32 16, %s20
        $region24: #{tpu_custom_call.1} parent=15 // pred_fallthru
          _
        // Predicated region
        $region25: #{tpu_custom_call.1} parent=15 // pred_check
          %p165 = pneg %p96
        $region26: #{tpu_custom_call.1} parent=15 // pred_check_branch
          %167 = sbr.rel (%p165) target = $region28
        $region27: #{tpu_custom_call.1} parent=15 // pred_region
          %p168 = scmp.lt.s32.totalorder %s19, 1
          %s169 = scalar_select %p168, %s19, 1
          %s170 = smul.addr %s169, 8
          %s171 = scalar_lea.vmem %s2, %s170
        $region28: #{tpu_custom_call.1} parent=15 // pred_fallthru
          _
      $region16: #{tpu_custom_call.1} parent=5 // pred_fallthru
        _
      %p172 = scmp.le.s32.totalorder 1, %s12
      %p173 = scmp.lt.s32.totalorder %s12, 5
      %p174 = pnand %p172, %p173
      %p175 = pneg %p174
      // Predicated region
      $region29: #{tpu_custom_call.1} parent=5 // pred_check
        _
      $region30: #{tpu_custom_call.1} parent=5 // pred_check_branch
        %177 = sbr.rel (%p174) target = $region32
      $region31: #{tpu_custom_call.1} parent=5 // pred_region
        %s178 = ssub.s32 %s12, 1
        %p179 = scmp.lt.s32.totalorder %s21, 1
        %s180 = scalar_select %p179, %s21, 1
        %s181 = smul.addr %s180, 8
        %s182 = scalar_lea.vmem %s0, %s181
        %p183 = pneg %p50
        %p184 = pneg %p47
        %s185 = smul.u32 16, %s22
        %p186 = scmp.lt.s32.totalorder %s185, 31
        %s187 = scalar_select %p186, %s185, 31
        %s188 = smul.addr %s187, 8
        %s189 = scalar_lea.vmem %s1, %s188
        %p190 = pneg %p76
        %p191 = pneg %p73
        %p192 = scmp.lt.s32.totalorder %s21, 1
        %s193 = scalar_select %p192, %s21, 1
        %s194 = smul.addr %s193, 8
        %s195 = scalar_lea.vmem %s2, %s194
        %p196 = pneg %p102
        %p197 = pneg %p99
        %p198 = pneg %p130
        %p199 = pneg %p127
        %s200 = sand.u32 %s117, 1
        %s201 = scalar_lea.sflag [#allocation3], %s200
        %s202 = sand.u32 %s117, 1
        %s203 = smul.addr %s202, 8
        %s204 = scalar_lea.vmem [#allocation2], %s203
        %p205 = scmp.lt.s32.totalorder %s21, 1
        %s206 = scalar_select %p205, %s21, 1
        %s207 = smul.addr %s206, 8
        %s208 = scalar_lea.vmem %s0, %s207
        %s209 = smul.u32 16, %s22
        %p210 = scmp.lt.s32.totalorder %s209, 31
        %s211 = scalar_select %p210, %s209, 31
        %s212 = smul.addr %s211, 8
        %s213 = scalar_lea.vmem %s1, %s212
        %s214 = smul.u32 16, %s22
        %p215 = scmp.lt.s32.totalorder %s21, 1
        %s216 = scalar_select %p215, %s21, 1
        %s217 = smul.addr %s216, 8
        %s218 = scalar_lea.vmem %s2, %s217
        %v219 = vld [vmem:[%s208] sm:$0xff]
        %v220 = vld [vmem:[%s213] sm:$0xff]
        %v221 = vld [vmem:[%s213 + $0x8] sm:$0xff]
        %v222 = vld [vmem:[%s213 + $0x10] sm:$0xff]
        %v223 = vld [vmem:[%s213 + $0x18] sm:$0xff]
        %v224 = vld [vmem:[%s213 + $0x20] sm:$0xff]
        %v225 = vld [vmem:[%s213 + $0x28] sm:$0xff]
        %v226 = vld [vmem:[%s213 + $0x30] sm:$0xff]
        %v227 = vld [vmem:[%s213 + $0x38] sm:$0xff]
        %v228 = vld [vmem:[%s213 + $0x40] sm:$0xff]
        %v229 = vld [vmem:[%s213 + $0x48] sm:$0xff]
        %v230 = vld [vmem:[%s213 + $0x50] sm:$0xff]
        %v231 = vld [vmem:[%s213 + $0x58] sm:$0xff]
        %v232 = vld [vmem:[%s213 + $0x60] sm:$0xff]
        %v233 = vld [vmem:[%s213 + $0x68] sm:$0xff]
        %v234 = vld [vmem:[%s213 + $0x70] sm:$0xff]
        %v235 = vld [vmem:[%s213 + $0x78] sm:$0xff]
        %vm236 = vcmask 261120
        %v238 = vsel %vm236, %v219, 0
        %v241 = vsel %vm236, %v220, 0
        %v244 = vsel %vm236, %v221, 0
        %v247 = vsel %vm236, %v222, 0
        %v250 = vsel %vm236, %v223, 0
        %v253 = vsel %vm236, %v224, 0
        %v256 = vsel %vm236, %v225, 0
        %v259 = vsel %vm236, %v226, 0
        %v262 = vsel %vm236, %v227, 0
        %v265 = vsel %vm236, %v228, 0
        %v268 = vsel %vm236, %v229, 0
        %v271 = vsel %vm236, %v230, 0
        %v274 = vsel %vm236, %v231, 0
        %v277 = vsel %vm236, %v232, 0
        %v280 = vsel %vm236, %v233, 0
        %v283 = vsel %vm236, %v234, 0
        %v286 = vsel %vm236, %v235, 0
        %288 = vmatpush.xpose.msra.mxu0 %v286
        %289 = vmatpush.xpose.msra.mxu0 %v283
        %290 = vmatpush.xpose.msra.mxu0 %v280
        %291 = vmatpush.xpose.msra.mxu0 %v277
        %292 = vmatpush.xpose.msra.mxu0 %v274
        %293 = vmatpush.xpose.msra.mxu0 %v271
        %294 = vmatpush.xpose.msra.mxu0 %v268
        %295 = vmatpush.xpose.msra.mxu0 %v265
        %296 = vmatpush.xpose.msra.mxu0 %v262
        %297 = vmatpush.xpose.msra.mxu0 %v259
        %298 = vmatpush.xpose.msra.mxu0 %v256
        %299 = vmatpush.xpose.msra.mxu0 %v253
        %300 = vmatpush.xpose.msra.mxu0 %v250
        %301 = vmatpush.xpose.msra.mxu0 %v247
        %302 = vmatpush.xpose.msra.mxu0 %v244
        %303 = vmatpush.xpose.msra.mxu0 %v241
        %304 = vmatmul.f32.gmra.mxu0 %v238
        %v305 = vpop.f32.mrf.mxu0
        %v306 = vadd.f32 0.0, %v305
        %307 = vdwg.mxu0
        %v308 = vmul.f32 %v220, %v220
        %v309 = vmul.f32 %v221, %v221
        %v310 = vmul.f32 %v222, %v222
        %v311 = vmul.f32 %v223, %v223
        %v312 = vmul.f32 %v224, %v224
        %v313 = vmul.f32 %v225, %v225
        %v314 = vmul.f32 %v226, %v226
        %v315 = vmul.f32 %v227, %v227
        %v316 = vmul.f32 %v228, %v228
        %v317 = vmul.f32 %v229, %v229
        %v318 = vmul.f32 %v230, %v230
        %v319 = vmul.f32 %v231, %v231
        %v320 = vmul.f32 %v232, %v232
        %v321 = vmul.f32 %v233, %v233
        %v322 = vmul.f32 %v234, %v234
        %v323 = vmul.f32 %v235, %v235
        %v324 = vsel %vm236, %v308, 0.0
        %325 = vadd.xlane.f32.xlu0 %v324
        %v326 = vpop.xlane.xlu0 %325
        %v327 = vsel %vm236, %v309, 0.0
        %328 = vadd.xlane.f32.xlu0 %v327
        %v329 = vpop.xlane.xlu0 %328
        %v330 = vsel %vm236, %v310, 0.0
        %331 = vadd.xlane.f32.xlu0 %v330
        %v332 = vpop.xlane.xlu0 %331
        %v333 = vsel %vm236, %v311, 0.0
        %334 = vadd.xlane.f32.xlu0 %v333
        %v335 = vpop.xlane.xlu0 %334
        %v336 = vsel %vm236, %v312, 0.0
        %337 = vadd.xlane.f32.xlu0 %v336
        %v338 = vpop.xlane.xlu0 %337
        %v339 = vsel %vm236, %v313, 0.0
        %340 = vadd.xlane.f32.xlu0 %v339
        %v341 = vpop.xlane.xlu0 %340
        %v342 = vsel %vm236, %v314, 0.0
        %343 = vadd.xlane.f32.xlu0 %v342
        %v344 = vpop.xlane.xlu0 %343
        %v345 = vsel %vm236, %v315, 0.0
        %346 = vadd.xlane.f32.xlu0 %v345
        %v347 = vpop.xlane.xlu0 %346
        %v348 = vsel %vm236, %v316, 0.0
        %349 = vadd.xlane.f32.xlu0 %v348
        %v350 = vpop.xlane.xlu0 %349
        %v351 = vsel %vm236, %v317, 0.0
        %352 = vadd.xlane.f32.xlu0 %v351
        %v353 = vpop.xlane.xlu0 %352
        %v354 = vsel %vm236, %v318, 0.0
        %355 = vadd.xlane.f32.xlu0 %v354
        %v356 = vpop.xlane.xlu0 %355
        %v357 = vsel %vm236, %v319, 0.0
        %358 = vadd.xlane.f32.xlu0 %v357
        %v359 = vpop.xlane.xlu0 %358
        %v360 = vsel %vm236, %v320, 0.0
        %361 = vadd.xlane.f32.xlu0 %v360
        %v362 = vpop.xlane.xlu0 %361
        %v363 = vsel %vm236, %v321, 0.0
        %364 = vadd.xlane.f32.xlu0 %v363
        %v365 = vpop.xlane.xlu0 %364
        %v366 = vsel %vm236, %v322, 0.0
        %367 = vadd.xlane.f32.xlu0 %v366
        %v368 = vpop.xlane.xlu0 %367
        %v369 = vsel %vm236, %v323, 0.0
        %370 = vadd.xlane.f32.xlu0 %v369
        %v371 = vpop.xlane.xlu0 %370
        %v372 = vmax.f32 %v326, 1e-24
        %v373 = vmax.f32 %v329, 1e-24
        %v374 = vmax.f32 %v332, 1e-24
        %v375 = vmax.f32 %v335, 1e-24
        %v376 = vmax.f32 %v338, 1e-24
        %v377 = vmax.f32 %v341, 1e-24
        %v378 = vmax.f32 %v344, 1e-24
        %v379 = vmax.f32 %v347, 1e-24
        %v380 = vmax.f32 %v350, 1e-24
        %v381 = vmax.f32 %v353, 1e-24
        %v382 = vmax.f32 %v356, 1e-24
        %v383 = vmax.f32 %v359, 1e-24
        %v384 = vmax.f32 %v362, 1e-24
        %v385 = vmax.f32 %v365, 1e-24
        %v386 = vmax.f32 %v368, 1e-24
        %v387 = vmax.f32 %v371, 1e-24
        %v388 = vrsqrt.pop %v372
        %v389 = vmul.f32 %v388, %v372
        %v390 = vmul.f32 %v389, %v388
        %v391 = vmul.f32 0.5, %v390
        %v392 = vsub.f32 1.5, %v391
        %v393 = vmul.f32 %v388, %v392
        %vm394 = vweird.f32 %v372
        %vm395 = vweird.f32 %v388
        %vm396 = vmor %vm394, %vm395
        %v397 = vsel %vm396, %v388, %v393
        %v398 = vrsqrt.pop %v373
        %v399 = vmul.f32 %v398, %v373
        %v400 = vmul.f32 %v399, %v398
        %v401 = vmul.f32 0.5, %v400
        %v402 = vsub.f32 1.5, %v401
        %v403 = vmul.f32 %v398, %v402
        %vm404 = vweird.f32 %v373
        %vm405 = vweird.f32 %v398
        %vm406 = vmor %vm404, %vm405
        %v407 = vsel %vm406, %v398, %v403
        %v408 = vrsqrt.pop %v374
        %v409 = vmul.f32 %v408, %v374
        %v410 = vmul.f32 %v409, %v408
        %v411 = vmul.f32 0.5, %v410
        %v412 = vsub.f32 1.5, %v411
        %v413 = vmul.f32 %v408, %v412
        %vm414 = vweird.f32 %v374
        %vm415 = vweird.f32 %v408
        %vm416 = vmor %vm414, %vm415
        %v417 = vsel %vm416, %v408, %v413
        %v418 = vrsqrt.pop %v375
        %v419 = vmul.f32 %v418, %v375
        %v420 = vmul.f32 %v419, %v418
        %v421 = vmul.f32 0.5, %v420
        %v422 = vsub.f32 1.5, %v421
        %v423 = vmul.f32 %v418, %v422
        %vm424 = vweird.f32 %v375
        %vm425 = vweird.f32 %v418
        %vm426 = vmor %vm424, %vm425
        %v427 = vsel %vm426, %v418, %v423
        %v428 = vrsqrt.pop %v376
        %v429 = vmul.f32 %v428, %v376
        %v430 = vmul.f32 %v429, %v428
        %v431 = vmul.f32 0.5, %v430
        %v432 = vsub.f32 1.5, %v431
        %v433 = vmul.f32 %v428, %v432
        %vm434 = vweird.f32 %v376
        %vm435 = vweird.f32 %v428
        %vm436 = vmor %vm434, %vm435
        %v437 = vsel %vm436, %v428, %v433
        %v438 = vrsqrt.pop %v377
        %v439 = vmul.f32 %v438, %v377
        %v440 = vmul.f32 %v439, %v438
        %v441 = vmul.f32 0.5, %v440
        %v442 = vsub.f32 1.5, %v441
        %v443 = vmul.f32 %v438, %v442
        %vm444 = vweird.f32 %v377
        %vm445 = vweird.f32 %v438
        %vm446 = vmor %vm444, %vm445
        %v447 = vsel %vm446, %v438, %v443
        %v448 = vrsqrt.pop %v378
        %v449 = vmul.f32 %v448, %v378
        %v450 = vmul.f32 %v449, %v448
        %v451 = vmul.f32 0.5, %v450
        %v452 = vsub.f32 1.5, %v451
        %v453 = vmul.f32 %v448, %v452
        %vm454 = vweird.f32 %v378
        %vm455 = vweird.f32 %v448
        %vm456 = vmor %vm454, %vm455
        %v457 = vsel %vm456, %v448, %v453
        %v458 = vrsqrt.pop %v379
        %v459 = vmul.f32 %v458, %v379
        %v460 = vmul.f32 %v459, %v458
        %v461 = vmul.f32 0.5, %v460
        %v462 = vsub.f32 1.5, %v461
        %v463 = vmul.f32 %v458, %v462
        %vm464 = vweird.f32 %v379
        %vm465 = vweird.f32 %v458
        %vm466 = vmor %vm464, %vm465
        %v467 = vsel %vm466, %v458, %v463
        %v468 = vrsqrt.pop %v380
        %v469 = vmul.f32 %v468, %v380
        %v470 = vmul.f32 %v469, %v468
        %v471 = vmul.f32 0.5, %v470
        %v472 = vsub.f32 1.5, %v471
        %v473 = vmul.f32 %v468, %v472
        %vm474 = vweird.f32 %v380
        %vm475 = vweird.f32 %v468
        %vm476 = vmor %vm474, %vm475
        %v477 = vsel %vm476, %v468, %v473
        %v478 = vrsqrt.pop %v381
        %v479 = vmul.f32 %v478, %v381
        %v480 = vmul.f32 %v479, %v478
        %v481 = vmul.f32 0.5, %v480
        %v482 = vsub.f32 1.5, %v481
        %v483 = vmul.f32 %v478, %v482
        %vm484 = vweird.f32 %v381
        %vm485 = vweird.f32 %v478
        %vm486 = vmor %vm484, %vm485
        %v487 = vsel %vm486, %v478, %v483
        %v488 = vrsqrt.pop %v382
        %v489 = vmul.f32 %v488, %v382
        %v490 = vmul.f32 %v489, %v488
        %v491 = vmul.f32 0.5, %v490
        %v492 = vsub.f32 1.5, %v491
        %v493 = vmul.f32 %v488, %v492
        %vm494 = vweird.f32 %v382
        %vm495 = vweird.f32 %v488
        %vm496 = vmor %vm494, %vm495
        %v497 = vsel %vm496, %v488, %v493
        %v498 = vrsqrt.pop %v383
        %v499 = vmul.f32 %v498, %v383
        %v500 = vmul.f32 %v499, %v498
        %v501 = vmul.f32 0.5, %v500
        %v502 = vsub.f32 1.5, %v501
        %v503 = vmul.f32 %v498, %v502
        %vm504 = vweird.f32 %v383
        %vm505 = vweird.f32 %v498
        %vm506 = vmor %vm504, %vm505
        %v507 = vsel %vm506, %v498, %v503
        %v508 = vrsqrt.pop %v384
        %v509 = vmul.f32 %v508, %v384
        %v510 = vmul.f32 %v509, %v508
        %v511 = vmul.f32 0.5, %v510
        %v512 = vsub.f32 1.5, %v511
        %v513 = vmul.f32 %v508, %v512
        %vm514 = vweird.f32 %v384
        %vm515 = vweird.f32 %v508
        %vm516 = vmor %vm514, %vm515
        %v517 = vsel %vm516, %v508, %v513
        %v518 = vrsqrt.pop %v385
        %v519 = vmul.f32 %v518, %v385
        %v520 = vmul.f32 %v519, %v518
        %v521 = vmul.f32 0.5, %v520
        %v522 = vsub.f32 1.5, %v521
        %v523 = vmul.f32 %v518, %v522
        %vm524 = vweird.f32 %v385
        %vm525 = vweird.f32 %v518
        %vm526 = vmor %vm524, %vm525
        %v527 = vsel %vm526, %v518, %v523
        %v528 = vrsqrt.pop %v386
        %v529 = vmul.f32 %v528, %v386
        %v530 = vmul.f32 %v529, %v528
        %v531 = vmul.f32 0.5, %v530
        %v532 = vsub.f32 1.5, %v531
        %v533 = vmul.f32 %v528, %v532
        %vm534 = vweird.f32 %v386
        %vm535 = vweird.f32 %v528
        %vm536 = vmor %vm534, %vm535
        %v537 = vsel %vm536, %v528, %v533
        %v538 = vrsqrt.pop %v387
        %v539 = vmul.f32 %v538, %v387
        %v540 = vmul.f32 %v539, %v538
        %v541 = vmul.f32 0.5, %v540
        %v542 = vsub.f32 1.5, %v541
        %v543 = vmul.f32 %v538, %v542
        %vm544 = vweird.f32 %v387
        %vm545 = vweird.f32 %v538
        %vm546 = vmor %vm544, %vm545
        %v547 = vsel %vm546, %v538, %v543
        %v564 = vlaneseq
        %v565 = vand.u32 %v564, 127
        %v566 = vperm.slane %v397, %v565
        %v567 = vadd.s32 %v565, 4294967288
        %v568 = vperm.slane %v407, %v567
        %vm569 = vcmask 130112
        %v570 = vsel %vm569, %v568, %v566
        %v571 = vadd.s32 %v565, 4294967280
        %v572 = vperm.slane %v417, %v571
        %vm573 = vcmask 195712
        %v574 = vsel %vm573, %v572, %v570
        %v575 = vadd.s32 %v565, 4294967272
        %v576 = vperm.slane %v427, %v575
        %vm577 = vcmask 261312
        %v578 = vsel %vm577, %v576, %v574
        %v579 = vadd.s32 %v565, 4294967264
        %v580 = vperm.slane %v437, %v579
        %vm581 = vcmask 326912
        %v582 = vsel %vm581, %v580, %v578
        %v583 = vadd.s32 %v565, 4294967256
        %v584 = vperm.slane %v447, %v583
        %vm585 = vcmask 392512
        %v586 = vsel %vm585, %v584, %v582
        %v587 = vadd.s32 %v565, 4294967248
        %v588 = vperm.slane %v457, %v587
        %vm589 = vcmask 458112
        %v590 = vsel %vm589, %v588, %v586
        %v591 = vadd.s32 %v565, 4294967240
        %v592 = vperm.slane %v467, %v591
        %vm593 = vcmask 523712
        %v594 = vsel %vm593, %v592, %v590
        %v595 = vadd.s32 %v565, 4294967232
        %v596 = vperm.slane %v477, %v595
        %vm597 = vcmask 589312
        %v598 = vsel %vm597, %v596, %v594
        %v599 = vadd.s32 %v565, 4294967224
        %v600 = vperm.slane %v487, %v599
        %vm601 = vcmask 654912
        %v602 = vsel %vm601, %v600, %v598
        %v603 = vadd.s32 %v565, 4294967216
        %v604 = vperm.slane %v497, %v603
        %vm605 = vcmask 720512
        %v606 = vsel %vm605, %v604, %v602
        %v607 = vadd.s32 %v565, 4294967208
        %v608 = vperm.slane %v507, %v607
        %vm609 = vcmask 786112
        %v610 = vsel %vm609, %v608, %v606
        %v611 = vadd.s32 %v565, 4294967200
        %v612 = vperm.slane %v517, %v611
        %vm613 = vcmask 851712
        %v614 = vsel %vm613, %v612, %v610
        %v615 = vadd.s32 %v565, 4294967192
        %v616 = vperm.slane %v527, %v615
        %vm617 = vcmask 917312
        %v618 = vsel %vm617, %v616, %v614
        %v619 = vadd.s32 %v565, 4294967184
        %v620 = vperm.slane %v537, %v619
        %vm621 = vcmask 982912
        %v622 = vsel %vm621, %v620, %v618
        %v623 = vadd.s32 %v565, 4294967176
        %v624 = vperm.slane %v547, %v623
        %vm625 = vcmask 1048512
        %v626 = vsel %vm625, %v624, %v622
        %vm627 = vcmask 1042434
        %v628 = vsel %vm627, %v626, %v626
        %vm629 = vcmask 1043459
        %v630 = vsel %vm629, %v626, %v628
        %vm631 = vcmask 1044484
        %v632 = vsel %vm631, %v626, %v630
        %vm633 = vcmask 1045509
        %v634 = vsel %vm633, %v626, %v632
        %vm635 = vcmask 1046534
        %v636 = vsel %vm635, %v626, %v634
        %vm637 = vcmask 1047559
        %v638 = vsel %vm637, %v626, %v636
        %v640 = vmul.f32 %v306, %v638
        %v641 = vmul.f32 %v640, 30.0
        %v642 = vmul.f32 %v640, %v640
        %v643 = vsub.f32 1.0, %v642
        %v644 = vmax.f32 %v643, 0.0
        %v645 = vrsqrt.pop %v644
        %v646 = vmul.f32 %v645, %v644
        %v647 = vmul.f32 %v646, %v645
        %v648 = vmul.f32 0.5, %v647
        %v649 = vsub.f32 1.5, %v648
        %v650 = vmul.f32 %v645, %v649
        %v651 = vmul.f32 %v644, %v650
        %vm652 = vcmp.eq.f32.partialorder %v644, inf
        %v653 = vsel %vm652, %v644, %v651
        %vm654 = vcmp.eq.f32.partialorder %v644, 0.0
        %v655 = vand.u32 %v644, 2147483648
        %v656 = vsel %vm654, %v655, %v653
        %v657 = vmul.f32 %v640, 26.327477
        %v658 = vmul.f32 %v656, 14.382766
        %v659 = vsub.f32 %v657, %v658
        %vm660 = vcmp.gt.f32.partialorder %v640, -0.87758255
        %v661 = vsub.f32 %v641, 7.191383
        %v662 = vsel %vm660, %v659, %v661
        %s663 = smul.u32 %s22, 128
        %v664 = vstv %s663
        %v665 = vadd.s32 %v664, %v565
        %v666 = vld [vmem:[%s218] sm:$0xff]
        %667 = vset.pattern.permute.xlu0 0
        %668 = vperm.xlu0 %667, %v666
        %v669 = vpop.permute.xlu0 %668
        %vm670 = vcmp.eq.s32.totalorder %v665, %v669
        %v671 = vsel %vm670, %v662, %v641
        %672 = vst [vmem:[%s204] sm:$0xff] %v671
        %s673 = sand.u32 %s117, 1
        %s674 = scalar_lea.sflag [#allocation3], %s673
        %s675 = sand.u32 %s117, 1
        %s676 = smul.addr %s675, 8
        %s677 = scalar_lea.vmem [#allocation2], %s676
        // Predicated region
        $region33: #{tpu_custom_call.1} parent=31 // pred_check
          %p678 = pneg %p127
        $region34: #{tpu_custom_call.1} parent=31 // pred_check_branch
          %680 = sbr.rel (%p678) target = $region36
        $region35: #{tpu_custom_call.1} parent=31 // pred_region
          %682 = vsyncadd %s674, 0
          %s683 = smul.addr %s21, 2
          %s684 = sadd.s32 %s22, %s683
          %s685 = smul.addr %s684, 8
          %s686 = scalar_lea.hbm %s3, %s685
          %s688 = sshll.u32 %s677, 4
          %s689 = int_to_ptr.vmem [resolvable:$true] %s688
          %s690 = sshll.u32 %s686, 4
          %s691 = int_to_ptr.hbm [resolvable:$true] %s690
          %693 = dma.vmem_to_hbm [thread:$0]  %s689, 128, %s691, %s674
        $region36: #{tpu_custom_call.1} parent=31 // pred_fallthru
          _
      $region32: #{tpu_custom_call.1} parent=5 // pred_fallthru
        _
      %p694 = scmp.le.s32.totalorder 2, %s12
      // Predicated region
      $region37: #{tpu_custom_call.1} parent=5 // pred_check
        %p695 = pneg %p694
      $region38: #{tpu_custom_call.1} parent=5 // pred_check_branch
        %697 = sbr.rel (%p695) target = $region40
      $region39: #{tpu_custom_call.1} parent=5 // pred_region
        %s698 = ssub.s32 %s12, 2
        // Predicated region
        $region41: #{tpu_custom_call.1} parent=39 // pred_check
          %p699 = pneg %p133
        $region42: #{tpu_custom_call.1} parent=39 // pred_check_branch
          %701 = sbr.rel (%p699) target = $region44
        $region43: #{tpu_custom_call.1} parent=39 // pred_region
          %s702 = sand.u32 %s118, 1
          %s703 = scalar_lea.sflag [#allocation3], %s702
          %s704 = sand.u32 %s118, 1
          %s705 = smul.addr %s704, 8
          %s706 = scalar_lea.vmem [#allocation2], %s705
          %708 = dma.done %s703, 128
        $region44: #{tpu_custom_call.1} parent=39 // pred_fallthru
          _
      $region40: #{tpu_custom_call.1} parent=5 // pred_fallthru
        _
    $region6: #{tpu_custom_call.1} parent=1 // loop_footer
      %s16 = sadd.s32 1, %s12
    $region7: #{tpu_custom_call.1} parent=1 // loop_footer_branch
      %11 = sbr.rel target = $region3
    $region8: #{tpu_custom_call.1} parent=1 // loop_exit
      _
    %709 = vsyncpa [#allocation3], 1
    %s710 = scalar_lea.sflag [#allocation3], 1
    %711 = vsyncpa %s710, 1

</llo_original>
